<compile_context>
chip_gen: v5e
topology: v5e:2x2
jax: 0.10.0
libtpu: 0.0.40
codegen_flags: <defaults>
</compile_context>

<pallas_src>
import math
import functools

import jax
import jax.numpy as jnp
from jax.experimental import pallas as pl
from jax.experimental.pallas import tpu as pltpu

LOG_SQRT_2PI = 0.5 * math.log(2.0 * math.pi)


def _round_up(x, m):
    return (x + m - 1) // m * m


def pick_block_b(batch):
    """Generation-tuned grid sizing for an overhead-bound kernel.

    v5e/v6e: 1 TensorCore  -> a single fat grid step (no serial-loop overhead).
    v7x    : 2 TensorCores -> exactly 2 fat steps so ("parallel",) shards one
             step per core.  Per-step rows capped at 2048 for huge batches.
    """
    try:
        kind = jax.devices()[0].device_kind.lower()
    except Exception:
        kind = ""
    steps = 2 if "v7" in kind else 1
    block = _round_up(pl.cdiv(batch, steps), 8)
    return max(8, min(block, 2048))


# ----------------------------------------------------------------------------- kernel
def _agent_kernel(x_ref, noise_ref, w_ref, b_ref, out_ref, *, obs_pad, fused):
    # f32 bias/constant slab rows:
    #   0: b1   1: b2
    #   2: b3   (actor bias [0,A), critic bias at col A, lp_const at col A+1)
    #   3: std = exp(logstd)  (zero beyond A)
    #   4: one-hot selector for the logprob column (A+1)
    #   5: logstd (wrapper-side entropy only; unused in-kernel)
    b1 = b_ref[0:1, :]
    b2 = b_ref[1:2, :]
    b3 = b_ref[2:3, :]
    std = b_ref[3:4, :]
    lp_col = b_ref[4:5, :]

    # bf16 weight slab: W1 = [wa1|wc1], W2 = blockdiag(wa2,wc2), W3 = [wa3|wc3|0]
    w1 = w_ref[0:obs_pad, :]
    w2 = w_ref[obs_pad:obs_pad + fused, :]
    w3 = w_ref[obs_pad + fused:obs_pad + 2 * fused, :]

    # bf16 MXU operands, f32 accumulate; bias add / tanh stay in f32 vregs.
    x = x_ref[...]
    h = jnp.tanh(jnp.dot(x.astype(jnp.bfloat16), w1,
                         preferred_element_type=jnp.float32) + b1)
    h = jnp.tanh(jnp.dot(h.astype(jnp.bfloat16), w2,
                         preferred_element_type=jnp.float32) + b2)
    out3 = jnp.dot(h.astype(jnp.bfloat16), w3,
                   preferred_element_type=jnp.float32) + b3
    # out3 lanes: [0,A) actor mean, A = critic value, A+1 = lp_const, rest = 0

    noise = noise_ref[...]                                   # zero beyond lane A
    # log_prob(action).sum(1) = -0.5*sum(noise^2) - sum(logstd) - A*log(sqrt(2pi));
    # the batch-invariant part is already folded into b3[:, A+1] at pack time.
    lp = -0.5 * jnp.sum(noise * noise, axis=1, keepdims=True)   # (bB, 1)

    # packed, lane-dense output: action | value | logprob | zero pad
    out_ref[...] = out3 + std * noise + lp * lp_col


# ----------------------------------------------------------------------------- wrapper
@functools.partial(
    jax.jit,
    static_argnames=("act_dim", "obs_pad", "fused", "out_pad", "block_b"))
def agent_forward(x, noise, w_slab, b_slab, *,
                  act_dim, obs_pad, fused, out_pad, block_b):
    B, obs_dim = x.shape
    b_pad = _round_up(B, block_b)

    # single lax.pad HLOs (no zeros + dynamic_update_slice round trip)
    x_p = jnp.pad(x, ((0, b_pad - B), (0, obs_pad - obs_dim)))
    noise_p = jnp.pad(noise, ((0, b_pad - B), (0, out_pad - act_dim)))

    kernel = functools.partial(_agent_kernel, obs_pad=obs_pad, fused=fused)

    out = pl.pallas_call(
        kernel,
        out_shape=jax.ShapeDtypeStruct((b_pad, out_pad), jnp.float32),
        grid=(b_pad // block_b,),
        in_specs=[
            pl.BlockSpec((block_b, obs_pad), lambda i: (i, 0)),   # x tile
            pl.BlockSpec((block_b, out_pad), lambda i: (i, 0)),   # noise tile
            pl.BlockSpec(w_slab.shape, lambda i: (0, 0)),         # weights: VMEM-resident
            pl.BlockSpec(b_slab.shape, lambda i: (0, 0)),         # biases/consts: resident
        ],
        out_specs=pl.BlockSpec((block_b, out_pad), lambda i: (i, 0)),
        compiler_params=pltpu.CompilerParams(
            dimension_semantics=("parallel",)),                   # shards across TCs on v7x
    )(x_p, noise_p, w_slab, b_slab)

    out = out[:B]
    action = out[:, :act_dim]
    value = out[:, act_dim:act_dim + 1]
    logprob = out[:, act_dim + 1]

    # entropy depends only on logstd -> computed outside the kernel
    logstd_row = b_slab[5:6, :act_dim]
    entropy = jnp.broadcast_to(0.5 + LOG_SQRT_2PI + logstd_row, (B, act_dim))
    return action, logprob, value, entropy


# ----------------------------------------------------------------------------- params
def init_params(key, obs_dim, act_dim, hidden=64):
    ks = jax.random.split(key, 10)

    def lin(k, fan_in, fan_out, scale):
        return scale * jax.random.normal(k, (fan_in, fan_out), jnp.float32) / jnp.sqrt(fan_in)

    sqrt2 = math.sqrt(2.0)
    return {
        # actor_mean
        "wa1": lin(ks[0], obs_dim, hidden, sqrt2), "ba1": jnp.zeros((1, hidden), jnp.float32),
        "wa2": lin(ks[1], hidden, hidden, sqrt2),  "ba2": jnp.zeros((1, hidden), jnp.float32),
        "wa3": lin(ks[2], hidden, act_dim, 1.0),   "ba3": jnp.zeros((1, act_dim), jnp.float32),
        "logstd": jnp.zeros((1, act_dim), jnp.float32),
        # critic
        "wc1": lin(ks[3], obs_dim, hidden, sqrt2), "bc1": jnp.zeros((1, hidden), jnp.float32),
        "wc2": lin(ks[4], hidden, hidden, sqrt2),  "bc2": jnp.zeros((1, hidden), jnp.float32),
        "wc3": lin(ks[5], hidden, 1, 1.0),         "bc3": jnp.zeros((1, 1), jnp.float32),
    }


def pack_params(p, obs_dim, act_dim, hidden=64):
    """One-time fusion of actor+critic params into two padded slabs."""
    fused = 2 * hidden
    out_pad = 128
    assert fused == 128, "packing assumes hidden=64 (fused hidden width 128)"
    # TODO(synk): if hidden ever grows, pack to a 256-lane fused width so the
    # v7x 2x256 MXU is fully fed; 128 lanes is the natural width for hidden=64.
    assert act_dim + 2 <= out_pad
    obs_pad = _round_up(obs_dim, 8)

    w1 = jnp.zeros((obs_pad, fused), jnp.float32)
    w1 = w1.at[:obs_dim, :hidden].set(p["wa1"])
    w1 = w1.at[:obs_dim, hidden:].set(p["wc1"])

    w2 = jnp.zeros((fused, fused), jnp.float32)
    w2 = w2.at[:hidden, :hidden].set(p["wa2"])
    w2 = w2.at[hidden:, hidden:].set(p["wc2"])

    w3 = jnp.zeros((fused, out_pad), jnp.float32)
    w3 = w3.at[:hidden, :act_dim].set(p["wa3"])
    w3 = w3.at[hidden:, act_dim:act_dim + 1].set(p["wc3"])

    # bf16 matmul operands (f32 accumulate in-kernel): avoids the f32 multi-pass
    # MXU penalty on v6e/v7x and halves resident weight traffic.
    w_slab = jnp.concatenate([w1, w2, w3], axis=0).astype(jnp.bfloat16)

    logstd = p["logstd"][0]                                   # (act_dim,)
    lp_const = -(jnp.sum(logstd) + act_dim * LOG_SQRT_2PI)    # batch-invariant logprob part

    b_slab = jnp.zeros((8, out_pad), jnp.float32)
    b_slab = b_slab.at[0, :hidden].set(p["ba1"][0])
    b_slab = b_slab.at[0, hidden:fused].set(p["bc1"][0])
    b_slab = b_slab.at[1, :hidden].set(p["ba2"][0])
    b_slab = b_slab.at[1, hidden:fused].set(p["bc2"][0])
    b_slab = b_slab.at[2, :act_dim].set(p["ba3"][0])
    b_slab = b_slab.at[2, act_dim].set(p["bc3"][0, 0])
    b_slab = b_slab.at[2, act_dim + 1].set(lp_const)          # folded into out3
    b_slab = b_slab.at[3, :act_dim].set(jnp.exp(logstd))      # std, zero beyond act_dim
    b_slab = b_slab.at[4, act_dim + 1].set(1.0)               # one-hot logprob column
    b_slab = b_slab.at[5, :act_dim].set(logstd)               # for wrapper-side entropy

    dims = dict(obs_pad=obs_pad, act_dim=act_dim, fused=fused, out_pad=out_pad)
    return {"w_slab": w_slab, "b_slab": b_slab}, dims


# ----------------------------------------------------------------------------- demo
if __name__ == "__main__":
    B, OBS, ACT, HID = 256, 16, 4, 64

    key = jax.random.PRNGKey(0)
    k_params, k_x, k_noise = jax.random.split(key, 3)

    params = init_params(k_params, OBS, ACT, HID)
    packed, dims = pack_params(params, OBS, ACT, HID)

    x = jax.random.normal(k_x, (B, OBS), jnp.float32)
    # Gaussian draw for dist.sample(); affine transform happens in-kernel.
    noise = jax.random.normal(k_noise, (B, ACT), jnp.float32)

    block_b = pick_block_b(B)     # 1 fat step on v5e/v6e, 2 parallel steps on v7x

    action, logprob, value, entropy = agent_forward(
        x, noise, packed["w_slab"], packed["b_slab"],
        act_dim=dims["act_dim"], obs_pad=dims["obs_pad"],
        fused=dims["fused"], out_pad=dims["out_pad"], block_b=block_b)
    jax.block_until_ready((action, logprob, value, entropy))

    # sanity check against a pure-JAX f32 reference built from the UNfused params
    def ref(x, noise, p):
        h = jnp.tanh(x @ p["wa1"] + p["ba1"])
        h = jnp.tanh(h @ p["wa2"] + p["ba2"])
        mean = h @ p["wa3"] + p["ba3"]
        std = jnp.exp(p["logstd"])
        act = mean + std * noise
        lp = (-((act - mean) ** 2) / (2 * std ** 2) - p["logstd"] - LOG_SQRT_2PI).sum(1)
        ent = jnp.broadcast_to(0.5 + LOG_SQRT_2PI + p["logstd"], mean.shape)
        c = jnp.tanh(x @ p["wc1"] + p["bc1"])
        c = jnp.tanh(c @ p["wc2"] + p["bc2"])
        val = c @ p["wc3"] + p["bc3"]
        return act, lp, val, ent

    r_act, r_lp, r_val, r_ent = ref(x, noise, params)
    assert action.shape == (B, ACT) and logprob.shape == (B,)
    assert value.shape == (B, 1) and entropy.shape == (B, ACT)
    # bf16 matmul operands -> relaxed tolerance for action/value (mean path)
    assert jnp.allclose(action, r_act, rtol=2e-2, atol=2e-2)
    assert jnp.allclose(value, r_val, rtol=2e-2, atol=2e-2)
    # logprob/entropy use only f32 noise + f32 pack-time constants -> tight
    assert jnp.allclose(logprob, r_lp, atol=1e-4)
    assert jnp.allclose(entropy, r_ent, atol=1e-5)

    print("KERNEL_OK")
</pallas_src>

<mosaic_0001>
module attributes {stable_mosaic.version = 11 : i64} {
  func.func @_agent_kernel(%arg0: i32, %arg1: memref<256x16xf32, #tpu.memory_space<vmem>>, %arg2: memref<256x128xf32, #tpu.memory_space<vmem>>, %arg3: memref<272x128xbf16, #tpu.memory_space<vmem>>, %arg4: memref<8x128xf32, #tpu.memory_space<vmem>>, %arg5: memref<256x128xf32, #tpu.memory_space<vmem>>) attributes {dimension_semantics = [#tpu.dimension_semantics<parallel>], iteration_bounds = array<i64: 1>, scalar_prefetch = 0 : i64, scratch_operands = 0 : i64, tpu.core_type = #tpu.core_type<tc>, window_params = [{transform_indices = @transform_0, window_bounds = array<i64: 256, 16>}, {transform_indices = @transform_1, window_bounds = array<i64: 256, 128>}, {pipeline_mode = #tpu.pipeline_mode<synchronous>, transform_indices = @transform_2, window_bounds = array<i64: 272, 128>}, {pipeline_mode = #tpu.pipeline_mode<synchronous>, transform_indices = @transform_3, window_bounds = array<i64: 8, 128>}, {transform_indices = @transform_4, window_bounds = array<i64: 256, 128>}]} {
    %c0 = arith.constant 0 : index
    %c0_0 = arith.constant 0 : index
    %0 = vector.load %arg4[%c0, %c0_0] : memref<8x128xf32, #tpu.memory_space<vmem>>, vector<1x128xf32>
    %c1 = arith.constant 1 : index
    %c0_1 = arith.constant 0 : index
    %1 = vector.load %arg4[%c1, %c0_1] : memref<8x128xf32, #tpu.memory_space<vmem>>, vector<1x128xf32>
    %c2 = arith.constant 2 : index
    %c0_2 = arith.constant 0 : index
    %2 = vector.load %arg4[%c2, %c0_2] : memref<8x128xf32, #tpu.memory_space<vmem>>, vector<1x128xf32>
    %c3 = arith.constant 3 : index
    %c0_3 = arith.constant 0 : index
    %3 = vector.load %arg4[%c3, %c0_3] : memref<8x128xf32, #tpu.memory_space<vmem>>, vector<1x128xf32>
    %c4 = arith.constant 4 : index
    %c0_4 = arith.constant 0 : index
    %4 = vector.load %arg4[%c4, %c0_4] : memref<8x128xf32, #tpu.memory_space<vmem>>, vector<1x128xf32>
    %c0_5 = arith.constant 0 : index
    %c0_6 = arith.constant 0 : index
    %5 = vector.load %arg3[%c0_5, %c0_6] : memref<272x128xbf16, #tpu.memory_space<vmem>>, vector<16x128xbf16>
    %c16 = arith.constant 16 : index
    %c0_7 = arith.constant 0 : index
    %6 = vector.load %arg3[%c16, %c0_7] : memref<272x128xbf16, #tpu.memory_space<vmem>>, vector<128x128xbf16>
    %c144 = arith.constant 144 : index
    %c0_8 = arith.constant 0 : index
    %7 = vector.load %arg3[%c144, %c0_8] : memref<272x128xbf16, #tpu.memory_space<vmem>>, vector<128x128xbf16>
    %c0_9 = arith.constant 0 : index
    %c0_10 = arith.constant 0 : index
    %8 = vector.load %arg1[%c0_9, %c0_10] : memref<256x16xf32, #tpu.memory_space<vmem>>, vector<256x16xf32>
    %9 = arith.truncf %8 : vector<256x16xf32> to vector<256x16xbf16>
    %cst = arith.constant dense<0.000000e+00> : vector<256x128xf32>
    %10 = tpu.matmul %9, %5, %cst {dimension_numbers = #tpu.dot_dimension_numbers<[1], [0], [0], [1], [0, 0, 1, 1], [], []>} : vector<256x16xbf16>, vector<16x128xbf16>, vector<256x128xf32> -> vector<256x128xf32>
    %11 = vector.broadcast %0 : vector<1x128xf32> to vector<256x128xf32>
    %12 = arith.addf %10, %11 : vector<256x128xf32>
    %13 = math.tanh %12 : vector<256x128xf32>
    %14 = arith.truncf %13 : vector<256x128xf32> to vector<256x128xbf16>
    %cst_11 = arith.constant dense<0.000000e+00> : vector<256x128xf32>
    %15 = tpu.matmul %14, %6, %cst_11 {dimension_numbers = #tpu.dot_dimension_numbers<[1], [0], [0], [1], [0, 0, 1, 1], [], []>} : vector<256x128xbf16>, vector<128x128xbf16>, vector<256x128xf32> -> vector<256x128xf32>
    %16 = vector.broadcast %1 : vector<1x128xf32> to vector<256x128xf32>
    %17 = arith.addf %15, %16 : vector<256x128xf32>
    %18 = math.tanh %17 : vector<256x128xf32>
    %19 = arith.truncf %18 : vector<256x128xf32> to vector<256x128xbf16>
    %cst_12 = arith.constant dense<0.000000e+00> : vector<256x128xf32>
    %20 = tpu.matmul %19, %7, %cst_12 {dimension_numbers = #tpu.dot_dimension_numbers<[1], [0], [0], [1], [0, 0, 1, 1], [], []>} : vector<256x128xbf16>, vector<128x128xbf16>, vector<256x128xf32> -> vector<256x128xf32>
    %21 = vector.broadcast %2 : vector<1x128xf32> to vector<256x128xf32>
    %22 = arith.addf %20, %21 : vector<256x128xf32>
    %c0_13 = arith.constant 0 : index
    %c0_14 = arith.constant 0 : index
    %23 = vector.load %arg2[%c0_13, %c0_14] : memref<256x128xf32, #tpu.memory_space<vmem>>, vector<256x128xf32>
    %24 = arith.mulf %23, %23 : vector<256x128xf32>
    %cst_15 = arith.constant dense<0.000000e+00> : vector<256xf32>
    %25 = vector.multi_reduction <add>, %24, %cst_15 [1] : vector<256x128xf32> to vector<256xf32>
    %26 = vector.shape_cast %25 : vector<256xf32> to vector<256x1xf32>
    %cst_16 = arith.constant -5.000000e-01 : f32
    %27 = vector.broadcast %cst_16 : f32 to vector<256x1xf32>
    %28 = arith.mulf %27, %26 : vector<256x1xf32>
    %29 = vector.broadcast %3 : vector<1x128xf32> to vector<256x128xf32>
    %30 = arith.mulf %29, %23 : vector<256x128xf32>
    %31 = arith.addf %22, %30 : vector<256x128xf32>
    %32 = vector.broadcast %28 : vector<256x1xf32> to vector<256x128xf32>
    %33 = vector.broadcast %4 : vector<1x128xf32> to vector<256x128xf32>
    %34 = arith.mulf %32, %33 : vector<256x128xf32>
    %35 = arith.addf %31, %34 : vector<256x128xf32>
    %c0_17 = arith.constant 0 : index
    %c0_18 = arith.constant 0 : index
    %36 = vector.load %arg5[%c0_17, %c0_18] : memref<256x128xf32, #tpu.memory_space<vmem>>, vector<256x128xf32>
    tpu.vector_store %arg5[%c0_17, %c0_18], %35 {strides = array<i32>} : memref<256x128xf32, #tpu.memory_space<vmem>>, vector<256x128xf32>,
    return
  }
  func.func @transform_0(%arg0: i32) -> (i32, i32) {
    %c0_i32 = arith.constant 0 : i32
    %c0_i32_0 = arith.constant 0 : i32
    return %arg0, %c0_i32 : i32, i32
  }
  func.func @transform_1(%arg0: i32) -> (i32, i32) {
    %c0_i32 = arith.constant 0 : i32
    %c0_i32_0 = arith.constant 0 : i32
    return %arg0, %c0_i32 : i32, i32
  }
  func.func @transform_2(%arg0: i32) -> (i32, i32) {
    %c0_i32 = arith.constant 0 : i32
    %c0_i32_0 = arith.constant 0 : i32
    %c0_i32_1 = arith.constant 0 : i32
    return %c0_i32, %c0_i32_0 : i32, i32
  }
  func.func @transform_3(%arg0: i32) -> (i32, i32) {
    %c0_i32 = arith.constant 0 : i32
    %c0_i32_0 = arith.constant 0 : i32
    %c0_i32_1 = arith.constant 0 : i32
    return %c0_i32, %c0_i32_0 : i32, i32
  }
  func.func @transform_4(%arg0: i32) -> (i32, i32) {
    %c0_i32 = arith.constant 0 : i32
    %c0_i32_0 = arith.constant 0 : i32
    return %arg0, %c0_i32 : i32, i32
  }
}

</mosaic_0001>

<llo_original>
// kernel: agent_forward.1
$region0: #{agent_forward.1}
  #allocation0 [shape = 'u32[]', space=smem, size = 0x4, offset = 0x4, fixed_abs, tag = 'smem constant byte address 0x4 - core index']
  #allocation1 [shape = 'u32[72,128]{1,0:T(1,128)}', space=vmem, size = 0x9000, scoped, tag = 'internal scratch']
  %s0 = inlined_call_operand.vmem [shape: f32[256,16], index: 0, kind: input, shape index: {}]
  %s1 = inlined_call_operand.vmem [shape: f32[256,128], index: 1, kind: input, shape index: {}]
  %s2 = inlined_call_operand.vmem [shape: bf16[272,128], index: 2, kind: input, shape index: {}]
  %s3 = inlined_call_operand.vmem [shape: f32[8,128], index: 3, kind: input, shape index: {}]
  %s4 = inlined_call_operand.vmem [shape: f32[256,128], index: 4, kind: output, shape index: {}]
  %s5 = sld [smem:[#allocation0]]
  $region26: #{agent_forward.1} parent=0
    _
  %s7 = ssub.s32 1, %s5
  %s8 = scalar_select 0, %s7, %s5
  // Predicated region
  $region2: #{agent_forward.1} parent=0 // pred_check
    _
  $region3: #{agent_forward.1} parent=0 // pred_check_branch
    %10 = sbr.rel (0) target = $region5
  $region4: #{agent_forward.1} parent=0 // pred_region
    _
  $region5: #{agent_forward.1} parent=0 // pred_fallthru
    _
  // Predicated region
  $region6: #{agent_forward.1} parent=0 // pred_check
    _
  $region7: #{agent_forward.1} parent=0 // pred_check_branch
    %12 = sbr.rel (0) target = $region9
  $region8: #{agent_forward.1} parent=0 // pred_region
    _
  $region9: #{agent_forward.1} parent=0 // pred_fallthru
    _
  // Predicated region
  $region10: #{agent_forward.1} parent=0 // pred_check
    _
  $region11: #{agent_forward.1} parent=0 // pred_check_branch
    %14 = sbr.rel (0) target = $region13
  $region12: #{agent_forward.1} parent=0 // pred_region
    _
  $region13: #{agent_forward.1} parent=0 // pred_fallthru
    _
  // Predicated region
  $region14: #{agent_forward.1} parent=0 // pred_check
    _
  $region15: #{agent_forward.1} parent=0 // pred_check_branch
    %16 = sbr.rel (0) target = $region17
  $region16: #{agent_forward.1} parent=0 // pred_region
    _
  $region17: #{agent_forward.1} parent=0 // pred_fallthru
    _
  %v18 = vld [vmem:[%s3] sm:$0x1]
  %v19 = vld [vmem:[%s3 + $0x1] sm:$0x1]
  %v20 = vld [vmem:[%s3 + $0x2] sm:$0x1]
  %v21 = vld [vmem:[%s3 + $0x3] sm:$0x1]
  %v22 = vld [vmem:[%s3 + $0x4] sm:$0x1]
  %v23 = vld [vmem:[%s2] sm:$0xf]
  %v24 = vld [vmem:[%s2 + $0x4] sm:$0xf]
  %v25 = vld [vmem:[%s2 + $0x8] sm:$0xf]
  %v26 = vld [vmem:[%s2 + $0xc] sm:$0xf]
  %v27 = vld [vmem:[%s2 + $0x10] sm:$0xf]
  %v28 = vld [vmem:[%s2 + $0x14] sm:$0xf]
  %v29 = vld [vmem:[%s2 + $0x18] sm:$0xf]
  %v30 = vld [vmem:[%s2 + $0x1c] sm:$0xf]
  %v31 = vld [vmem:[%s2 + $0x20] sm:$0xf]
  %v32 = vld [vmem:[%s2 + $0x24] sm:$0xf]
  %v33 = vld [vmem:[%s2 + $0x28] sm:$0xf]
  %v34 = vld [vmem:[%s2 + $0x2c] sm:$0xf]
  %v35 = vld [vmem:[%s2 + $0x30] sm:$0xf]
  %v36 = vld [vmem:[%s2 + $0x34] sm:$0xf]
  %v37 = vld [vmem:[%s2 + $0x38] sm:$0xf]
  %v38 = vld [vmem:[%s2 + $0x3c] sm:$0xf]
  %v39 = vld [vmem:[%s2 + $0x40] sm:$0xf]
  %v40 = vld [vmem:[%s2 + $0x44] sm:$0xf]
  %v41 = vld [vmem:[%s2 + $0x48] sm:$0xf]
  %v42 = vld [vmem:[%s2 + $0x4c] sm:$0xf]
  %v43 = vld [vmem:[%s2 + $0x50] sm:$0xf]
  %v44 = vld [vmem:[%s2 + $0x54] sm:$0xf]
  %v45 = vld [vmem:[%s2 + $0x58] sm:$0xf]
  %v46 = vld [vmem:[%s2 + $0x5c] sm:$0xf]
  %v47 = vld [vmem:[%s2 + $0x60] sm:$0xf]
  %v48 = vld [vmem:[%s2 + $0x64] sm:$0xf]
  %v49 = vld [vmem:[%s2 + $0x68] sm:$0xf]
  %v50 = vld [vmem:[%s2 + $0x6c] sm:$0xf]
  %v51 = vld [vmem:[%s2 + $0x70] sm:$0xf]
  %v52 = vld [vmem:[%s2 + $0x74] sm:$0xf]
  %v53 = vld [vmem:[%s2 + $0x78] sm:$0xf]
  %v54 = vld [vmem:[%s2 + $0x7c] sm:$0xf]
  %v55 = vld [vmem:[%s2 + $0x80] sm:$0xf]
  %v56 = vld [vmem:[%s2 + $0x84] sm:$0xf]
  %v57 = vld [vmem:[%s0] sm:$0xff]
  %v58 = vld [vmem:[%s0 + $0x8] sm:$0xff]
  %v59 = vld [vmem:[%s0 + $0x10] sm:$0xff]
  %v60 = vld [vmem:[%s0 + $0x18] sm:$0xff]
  %v61 = vld [vmem:[%s0 + $0x20] sm:$0xff]
  %v62 = vld [vmem:[%s0 + $0x28] sm:$0xff]
  %v63 = vld [vmem:[%s0 + $0x30] sm:$0xff]
  %v64 = vld [vmem:[%s0 + $0x38] sm:$0xff]
  %v65 = vld [vmem:[%s0 + $0x40] sm:$0xff]
  %v66 = vld [vmem:[%s0 + $0x48] sm:$0xff]
  %v67 = vld [vmem:[%s0 + $0x50] sm:$0xff]
  %v68 = vld [vmem:[%s0 + $0x58] sm:$0xff]
  %v69 = vld [vmem:[%s0 + $0x60] sm:$0xff]
  %v70 = vld [vmem:[%s0 + $0x68] sm:$0xff]
  %v71 = vld [vmem:[%s0 + $0x70] sm:$0xff]
  %v72 = vld [vmem:[%s0 + $0x78] sm:$0xff]
  %v73 = vld [vmem:[%s0 + $0x80] sm:$0xff]
  %v74 = vld [vmem:[%s0 + $0x88] sm:$0xff]
  %v75 = vld [vmem:[%s0 + $0x90] sm:$0xff]
  %v76 = vld [vmem:[%s0 + $0x98] sm:$0xff]
  %v77 = vld [vmem:[%s0 + $0xa0] sm:$0xff]
  %v78 = vld [vmem:[%s0 + $0xa8] sm:$0xff]
  %v79 = vld [vmem:[%s0 + $0xb0] sm:$0xff]
  %v80 = vld [vmem:[%s0 + $0xb8] sm:$0xff]
  %v81 = vld [vmem:[%s0 + $0xc0] sm:$0xff]
  %v82 = vld [vmem:[%s0 + $0xc8] sm:$0xff]
  %v83 = vld [vmem:[%s0 + $0xd0] sm:$0xff]
  %v84 = vld [vmem:[%s0 + $0xd8] sm:$0xff]
  %v85 = vld [vmem:[%s0 + $0xe0] sm:$0xff]
  %v86 = vld [vmem:[%s0 + $0xe8] sm:$0xff]
  %v87 = vld [vmem:[%s0 + $0xf0] sm:$0xff]
  %v88 = vld [vmem:[%s0 + $0xf8] sm:$0xff]
  %v89 = vpack.c.bf16 %v58, %v57
  %v90 = vpack.c.bf16 %v60, %v59
  %v91 = vpack.c.bf16 %v62, %v61
  %v92 = vpack.c.bf16 %v64, %v63
  %v93 = vpack.c.bf16 %v66, %v65
  %v94 = vpack.c.bf16 %v68, %v67
  %v95 = vpack.c.bf16 %v70, %v69
  %v96 = vpack.c.bf16 %v72, %v71
  %v97 = vpack.c.bf16 %v74, %v73
  %v98 = vpack.c.bf16 %v76, %v75
  %v99 = vpack.c.bf16 %v78, %v77
  %v100 = vpack.c.bf16 %v80, %v79
  %v101 = vpack.c.bf16 %v82, %v81
  %v102 = vpack.c.bf16 %v84, %v83
  %v103 = vpack.c.bf16 %v86, %v85
  %v104 = vpack.c.bf16 %v88, %v87
  %v105 = vperm.slane %v18, 0
  %v108 = vunpack.c.l.b16 %v23
  %v109 = vunpack.c.l.b16 %v24
  %v110 = vpack.c.b16 %v109, %v108
  %vm112 = vcmask 130048
  %v114 = vsel %vm112, %v89, 0
  %v117 = vsel %vm112, %v90, 0
  %v120 = vsel %vm112, %v91, 0
  %v123 = vsel %vm112, %v92, 0
  %v126 = vsel %vm112, %v93, 0
  %v129 = vsel %vm112, %v94, 0
  %v132 = vsel %vm112, %v95, 0
  %v135 = vsel %vm112, %v96, 0
  %v138 = vsel %vm112, %v97, 0
  %v141 = vsel %vm112, %v98, 0
  %v144 = vsel %vm112, %v99, 0
  %v147 = vsel %vm112, %v100, 0
  %v150 = vsel %vm112, %v101, 0
  %v153 = vsel %vm112, %v102, 0
  %v156 = vsel %vm112, %v103, 0
  %v159 = vsel %vm112, %v104, 0
  %161 = vmatpush.bf16.msra.mxu0 0
  %162 = vmatpush.bf16.msra.mxu0 0
  %163 = vmatpush.bf16.msra.mxu0 0
  %164 = vmatpush.bf16.msra.mxu0 0
  %165 = vmatpush.bf16.msra.mxu0 0
  %166 = vmatpush.bf16.msra.mxu0 0
  %167 = vmatpush.bf16.msra.mxu0 0
  %168 = vmatpush.bf16.msra.mxu0 %v110
  %169 = vmatmul.bf16.gmra.mxu0 %v114
  %v170 = vpop.f32.mrf.mxu0
  %v171 = vadd.f32 %v105, %v170
  %v172 = vpop.f32.mrf.mxu0
  %v173 = vadd.f32 %v105, %v172
  %174 = vmatmul.bf16.gmra.mxu0 %v117
  %v175 = vpop.f32.mrf.mxu0
  %v176 = vadd.f32 %v105, %v175
  %v177 = vpop.f32.mrf.mxu0
  %v178 = vadd.f32 %v105, %v177
  %179 = vmatmul.bf16.gmra.mxu0 %v120
  %v180 = vpop.f32.mrf.mxu0
  %v181 = vadd.f32 %v105, %v180
  %v182 = vpop.f32.mrf.mxu0
  %v183 = vadd.f32 %v105, %v182
  %184 = vmatmul.bf16.gmra.mxu0 %v123
  %v185 = vpop.f32.mrf.mxu0
  %v186 = vadd.f32 %v105, %v185
  %v187 = vpop.f32.mrf.mxu0
  %v188 = vadd.f32 %v105, %v187
  %189 = vmatmul.bf16.gmra.mxu0 %v126
  %v190 = vpop.f32.mrf.mxu0
  %v191 = vadd.f32 %v105, %v190
  %v192 = vpop.f32.mrf.mxu0
  %v193 = vadd.f32 %v105, %v192
  %194 = vmatmul.bf16.gmra.mxu0 %v129
  %v195 = vpop.f32.mrf.mxu0
  %v196 = vadd.f32 %v105, %v195
  %v197 = vpop.f32.mrf.mxu0
  %v198 = vadd.f32 %v105, %v197
  %199 = vmatmul.bf16.gmra.mxu0 %v132
  %v200 = vpop.f32.mrf.mxu0
  %v201 = vadd.f32 %v105, %v200
  %v202 = vpop.f32.mrf.mxu0
  %v203 = vadd.f32 %v105, %v202
  %204 = vmatmul.bf16.gmra.mxu0 %v135
  %v205 = vpop.f32.mrf.mxu0
  %v206 = vadd.f32 %v105, %v205
  %v207 = vpop.f32.mrf.mxu0
  %v208 = vadd.f32 %v105, %v207
  %209 = vmatmul.bf16.gmra.mxu0 %v138
  %v210 = vpop.f32.mrf.mxu0
  %v211 = vadd.f32 %v105, %v210
  %v212 = vpop.f32.mrf.mxu0
  %v213 = vadd.f32 %v105, %v212
  %214 = vmatmul.bf16.gmra.mxu0 %v141
  %v215 = vpop.f32.mrf.mxu0
  %v216 = vadd.f32 %v105, %v215
  %v217 = vpop.f32.mrf.mxu0
  %v218 = vadd.f32 %v105, %v217
  %219 = vmatmul.bf16.gmra.mxu0 %v144
  %v220 = vpop.f32.mrf.mxu0
  %v221 = vadd.f32 %v105, %v220
  %v222 = vpop.f32.mrf.mxu0
  %v223 = vadd.f32 %v105, %v222
  %224 = vmatmul.bf16.gmra.mxu0 %v147
  %v225 = vpop.f32.mrf.mxu0
  %v226 = vadd.f32 %v105, %v225
  %v227 = vpop.f32.mrf.mxu0
  %v228 = vadd.f32 %v105, %v227
  %229 = vmatmul.bf16.gmra.mxu0 %v150
  %v230 = vpop.f32.mrf.mxu0
  %v231 = vadd.f32 %v105, %v230
  %v232 = vpop.f32.mrf.mxu0
  %v233 = vadd.f32 %v105, %v232
  %234 = vmatmul.bf16.gmra.mxu0 %v153
  %v235 = vpop.f32.mrf.mxu0
  %v236 = vadd.f32 %v105, %v235
  %v237 = vpop.f32.mrf.mxu0
  %v238 = vadd.f32 %v105, %v237
  %239 = vmatmul.bf16.gmra.mxu0 %v156
  %v240 = vpop.f32.mrf.mxu0
  %v241 = vadd.f32 %v105, %v240
  %v242 = vpop.f32.mrf.mxu0
  %v243 = vadd.f32 %v105, %v242
  %244 = vmatmul.bf16.gmra.mxu0 %v159
  %v245 = vpop.f32.mrf.mxu0
  %v246 = vadd.f32 %v105, %v245
  %v247 = vpop.f32.mrf.mxu0
  %v248 = vadd.f32 %v105, %v247
  %249 = vdwg.mxu0
  %v250 = vtanh.pop %v171
  %v251 = vtanh.pop %v173
  %v252 = vtanh.pop %v176
  %v253 = vtanh.pop %v178
  %v254 = vtanh.pop %v181
  %v255 = vtanh.pop %v183
  %v256 = vtanh.pop %v186
  %v257 = vtanh.pop %v188
  %v258 = vtanh.pop %v191
  %v259 = vtanh.pop %v193
  %v260 = vtanh.pop %v196
  %v261 = vtanh.pop %v198
  %v262 = vtanh.pop %v201
  %v263 = vtanh.pop %v203
  %v264 = vtanh.pop %v206
  %v265 = vtanh.pop %v208
  %v266 = vtanh.pop %v211
  %v267 = vtanh.pop %v213
  %v268 = vtanh.pop %v216
  %v269 = vtanh.pop %v218
  %v270 = vtanh.pop %v221
  %v271 = vtanh.pop %v223
  %v272 = vtanh.pop %v226
  %v273 = vtanh.pop %v228
  %v274 = vtanh.pop %v231
  %v275 = vtanh.pop %v233
  %v276 = vtanh.pop %v236
  %v277 = vtanh.pop %v238
  %v278 = vtanh.pop %v241
  %v279 = vtanh.pop %v243
  %v280 = vtanh.pop %v246
  %v281 = vtanh.pop %v248
  %v282 = vpack.c.bf16 %v251, %v250
  %v283 = vpack.c.bf16 %v253, %v252
  %v284 = vpack.c.bf16 %v255, %v254
  %v285 = vpack.c.bf16 %v257, %v256
  %v286 = vpack.c.bf16 %v259, %v258
  %v287 = vpack.c.bf16 %v261, %v260
  %v288 = vpack.c.bf16 %v263, %v262
  %v289 = vpack.c.bf16 %v265, %v264
  %v290 = vpack.c.bf16 %v267, %v266
  %v291 = vpack.c.bf16 %v269, %v268
  %v292 = vpack.c.bf16 %v271, %v270
  %v293 = vpack.c.bf16 %v273, %v272
  %v294 = vpack.c.bf16 %v275, %v274
  %v295 = vpack.c.bf16 %v277, %v276
  %v296 = vpack.c.bf16 %v279, %v278
  %v297 = vpack.c.bf16 %v281, %v280
  %v298 = vperm.slane %v19, 0
  %v315 = vunpack.c.l.b16 %v25
  %v316 = vunpack.c.l.b16 %v26
  %v317 = vunpack.c.l.b16 %v27
  %v318 = vunpack.c.l.b16 %v28
  %v319 = vunpack.c.l.b16 %v29
  %v320 = vunpack.c.l.b16 %v30
  %v321 = vunpack.c.l.b16 %v31
  %v322 = vunpack.c.l.b16 %v32
  %v323 = vunpack.c.l.b16 %v33
  %v324 = vunpack.c.l.b16 %v34
  %v325 = vunpack.c.l.b16 %v35
  %v326 = vunpack.c.l.b16 %v36
  %v327 = vunpack.c.l.b16 %v37
  %v328 = vunpack.c.l.b16 %v38
  %v329 = vunpack.c.l.b16 %v39
  %v330 = vunpack.c.l.b16 %v40
  %v331 = vpack.c.b16 %v316, %v315
  %v332 = vpack.c.b16 %v318, %v317
  %v333 = vpack.c.b16 %v320, %v319
  %v334 = vpack.c.b16 %v322, %v321
  %v335 = vpack.c.b16 %v324, %v323
  %v336 = vpack.c.b16 %v326, %v325
  %v337 = vpack.c.b16 %v328, %v327
  %v338 = vpack.c.b16 %v330, %v329
  %347 = vmatpush.bf16.msra.mxu0 %v338
  %348 = vmatpush.bf16.msra.mxu0 %v337
  %349 = vmatpush.bf16.msra.mxu0 %v336
  %350 = vmatpush.bf16.msra.mxu0 %v335
  %351 = vmatpush.bf16.msra.mxu0 %v334
  %352 = vmatpush.bf16.msra.mxu0 %v333
  %353 = vmatpush.bf16.msra.mxu0 %v332
  %354 = vmatpush.bf16.msra.mxu0 %v331
  %355 = vmatmul.bf16.gmra.mxu0 %v282
  %v356 = vpop.f32.mrf.mxu0
  %v357 = vadd.f32 %v298, %v356
  %v358 = vpop.f32.mrf.mxu0
  %v359 = vadd.f32 %v298, %v358
  %360 = vmatmul.bf16.gmra.mxu0 %v283
  %v361 = vpop.f32.mrf.mxu0
  %v362 = vadd.f32 %v298, %v361
  %v363 = vpop.f32.mrf.mxu0
  %v364 = vadd.f32 %v298, %v363
  %365 = vmatmul.bf16.gmra.mxu0 %v284
  %v366 = vpop.f32.mrf.mxu0
  %v367 = vadd.f32 %v298, %v366
  %v368 = vpop.f32.mrf.mxu0
  %v369 = vadd.f32 %v298, %v368
  %370 = vmatmul.bf16.gmra.mxu0 %v285
  %v371 = vpop.f32.mrf.mxu0
  %v372 = vadd.f32 %v298, %v371
  %v373 = vpop.f32.mrf.mxu0
  %v374 = vadd.f32 %v298, %v373
  %375 = vmatmul.bf16.gmra.mxu0 %v286
  %v376 = vpop.f32.mrf.mxu0
  %v377 = vadd.f32 %v298, %v376
  %v378 = vpop.f32.mrf.mxu0
  %v379 = vadd.f32 %v298, %v378
  %380 = vmatmul.bf16.gmra.mxu0 %v287
  %v381 = vpop.f32.mrf.mxu0
  %v382 = vadd.f32 %v298, %v381
  %v383 = vpop.f32.mrf.mxu0
  %v384 = vadd.f32 %v298, %v383
  %385 = vmatmul.bf16.gmra.mxu0 %v288
  %v386 = vpop.f32.mrf.mxu0
  %v387 = vadd.f32 %v298, %v386
  %v388 = vpop.f32.mrf.mxu0
  %v389 = vadd.f32 %v298, %v388
  %390 = vmatmul.bf16.gmra.mxu0 %v289
  %v391 = vpop.f32.mrf.mxu0
  %v392 = vadd.f32 %v298, %v391
  %v393 = vpop.f32.mrf.mxu0
  %v394 = vadd.f32 %v298, %v393
  %395 = vmatmul.bf16.gmra.mxu0 %v290
  %v396 = vpop.f32.mrf.mxu0
  %v397 = vadd.f32 %v298, %v396
  %v398 = vpop.f32.mrf.mxu0
  %v399 = vadd.f32 %v298, %v398
  %400 = vmatmul.bf16.gmra.mxu0 %v291
  %v401 = vpop.f32.mrf.mxu0
  %v402 = vadd.f32 %v298, %v401
  %v403 = vpop.f32.mrf.mxu0
  %v404 = vadd.f32 %v298, %v403
  %405 = vmatmul.bf16.gmra.mxu0 %v292
  %v406 = vpop.f32.mrf.mxu0
  %v407 = vadd.f32 %v298, %v406
  %v408 = vpop.f32.mrf.mxu0
  %v409 = vadd.f32 %v298, %v408
  %410 = vmatmul.bf16.gmra.mxu0 %v293
  %v411 = vpop.f32.mrf.mxu0
  %v412 = vadd.f32 %v298, %v411
  %v413 = vpop.f32.mrf.mxu0
  %v414 = vadd.f32 %v298, %v413
  %415 = vmatmul.bf16.gmra.mxu0 %v294
  %v416 = vpop.f32.mrf.mxu0
  %v417 = vadd.f32 %v298, %v416
  %v418 = vpop.f32.mrf.mxu0
  %v419 = vadd.f32 %v298, %v418
  %420 = vmatmul.bf16.gmra.mxu0 %v295
  %v421 = vpop.f32.mrf.mxu0
  %v422 = vadd.f32 %v298, %v421
  %v423 = vpop.f32.mrf.mxu0
  %v424 = vadd.f32 %v298, %v423
  %425 = vmatmul.bf16.gmra.mxu0 %v296
  %v426 = vpop.f32.mrf.mxu0
  %v427 = vadd.f32 %v298, %v426
  %v428 = vpop.f32.mrf.mxu0
  %v429 = vadd.f32 %v298, %v428
  %430 = vmatmul.bf16.gmra.mxu0 %v297
  %v431 = vpop.f32.mrf.mxu0
  %v432 = vadd.f32 %v298, %v431
  %v433 = vpop.f32.mrf.mxu0
  %v434 = vadd.f32 %v298, %v433
  %435 = vdwg.mxu0
  %v436 = vtanh.pop %v357
  %v437 = vtanh.pop %v359
  %v438 = vtanh.pop %v362
  %v439 = vtanh.pop %v364
  %v440 = vtanh.pop %v367
  %v441 = vtanh.pop %v369
  %v442 = vtanh.pop %v372
  %v443 = vtanh.pop %v374
  %v444 = vtanh.pop %v377
  %v445 = vtanh.pop %v379
  %v446 = vtanh.pop %v382
  %v447 = vtanh.pop %v384
  %v448 = vtanh.pop %v387
  %v449 = vtanh.pop %v389
  %v450 = vtanh.pop %v392
  %v451 = vtanh.pop %v394
  %v452 = vtanh.pop %v397
  %v453 = vtanh.pop %v399
  %v454 = vtanh.pop %v402
  %v455 = vtanh.pop %v404
  %v456 = vtanh.pop %v407
  %v457 = vtanh.pop %v409
  %v458 = vtanh.pop %v412
  %v459 = vtanh.pop %v414
  %v460 = vtanh.pop %v417
  %v461 = vtanh.pop %v419
  %v462 = vtanh.pop %v422
  %v463 = vtanh.pop %v424
  %v464 = vtanh.pop %v427
  %v465 = vtanh.pop %v429
  %v466 = vtanh.pop %v432
  %v467 = vtanh.pop %v434
  %v468 = vpack.c.bf16 %v437, %v436
  %v469 = vpack.c.bf16 %v439, %v438
  %v470 = vpack.c.bf16 %v441, %v440
  %v471 = vpack.c.bf16 %v443, %v442
  %v472 = vpack.c.bf16 %v445, %v444
  %v473 = vpack.c.bf16 %v447, %v446
  %v474 = vpack.c.bf16 %v449, %v448
  %v475 = vpack.c.bf16 %v451, %v450
  %v476 = vpack.c.bf16 %v453, %v452
  %v477 = vpack.c.bf16 %v455, %v454
  %v478 = vpack.c.bf16 %v457, %v456
  %v479 = vpack.c.bf16 %v459, %v458
  %v480 = vpack.c.bf16 %v461, %v460
  %v481 = vpack.c.bf16 %v463, %v462
  %v482 = vpack.c.bf16 %v465, %v464
  %v483 = vpack.c.bf16 %v467, %v466
  %v484 = vperm.slane %v20, 0
  %v501 = vunpack.c.l.b16 %v41
  %v502 = vunpack.c.l.b16 %v42
  %v503 = vunpack.c.l.b16 %v43
  %v504 = vunpack.c.l.b16 %v44
  %v505 = vunpack.c.l.b16 %v45
  %v506 = vunpack.c.l.b16 %v46
  %v507 = vunpack.c.l.b16 %v47
  %v508 = vunpack.c.l.b16 %v48
  %v509 = vunpack.c.l.b16 %v49
  %v510 = vunpack.c.l.b16 %v50
  %v511 = vunpack.c.l.b16 %v51
  %v512 = vunpack.c.l.b16 %v52
  %v513 = vunpack.c.l.b16 %v53
  %v514 = vunpack.c.l.b16 %v54
  %v515 = vunpack.c.l.b16 %v55
  %v516 = vunpack.c.l.b16 %v56
  %v517 = vpack.c.b16 %v502, %v501
  %v518 = vpack.c.b16 %v504, %v503
  %v519 = vpack.c.b16 %v506, %v505
  %v520 = vpack.c.b16 %v508, %v507
  %v521 = vpack.c.b16 %v510, %v509
  %v522 = vpack.c.b16 %v512, %v511
  %v523 = vpack.c.b16 %v514, %v513
  %v524 = vpack.c.b16 %v516, %v515
  %533 = vmatpush.bf16.msra.mxu0 %v524
  %534 = vmatpush.bf16.msra.mxu0 %v523
  %535 = vmatpush.bf16.msra.mxu0 %v522
  %536 = vmatpush.bf16.msra.mxu0 %v521
  %537 = vmatpush.bf16.msra.mxu0 %v520
  %538 = vmatpush.bf16.msra.mxu0 %v519
  %539 = vmatpush.bf16.msra.mxu0 %v518
  %540 = vmatpush.bf16.msra.mxu0 %v517
  %541 = vmatmul.bf16.gmra.mxu0 %v468
  %v542 = vpop.f32.mrf.mxu0
  %v543 = vadd.f32 %v484, %v542
  %v544 = vpop.f32.mrf.mxu0
  %v545 = vadd.f32 %v484, %v544
  %546 = vmatmul.bf16.gmra.mxu0 %v469
  %v547 = vpop.f32.mrf.mxu0
  %v548 = vadd.f32 %v484, %v547
  %v549 = vpop.f32.mrf.mxu0
  %v550 = vadd.f32 %v484, %v549
  %551 = vmatmul.bf16.gmra.mxu0 %v470
  %v552 = vpop.f32.mrf.mxu0
  %v553 = vadd.f32 %v484, %v552
  %v554 = vpop.f32.mrf.mxu0
  %v555 = vadd.f32 %v484, %v554
  %556 = vmatmul.bf16.gmra.mxu0 %v471
  %v557 = vpop.f32.mrf.mxu0
  %v558 = vadd.f32 %v484, %v557
  %v559 = vpop.f32.mrf.mxu0
  %v560 = vadd.f32 %v484, %v559
  %561 = vmatmul.bf16.gmra.mxu0 %v472
  %v562 = vpop.f32.mrf.mxu0
  %v563 = vadd.f32 %v484, %v562
  %v564 = vpop.f32.mrf.mxu0
  %v565 = vadd.f32 %v484, %v564
  %566 = vmatmul.bf16.gmra.mxu0 %v473
  %v567 = vpop.f32.mrf.mxu0
  %v568 = vadd.f32 %v484, %v567
  %v569 = vpop.f32.mrf.mxu0
  %v570 = vadd.f32 %v484, %v569
  %571 = vmatmul.bf16.gmra.mxu0 %v474
  %v572 = vpop.f32.mrf.mxu0
  %v573 = vadd.f32 %v484, %v572
  %v574 = vpop.f32.mrf.mxu0
  %v575 = vadd.f32 %v484, %v574
  %576 = vmatmul.bf16.gmra.mxu0 %v475
  %v577 = vpop.f32.mrf.mxu0
  %v578 = vadd.f32 %v484, %v577
  %v579 = vpop.f32.mrf.mxu0
  %v580 = vadd.f32 %v484, %v579
  %581 = vmatmul.bf16.gmra.mxu0 %v476
  %v582 = vpop.f32.mrf.mxu0
  %v583 = vadd.f32 %v484, %v582
  %v584 = vpop.f32.mrf.mxu0
  %v585 = vadd.f32 %v484, %v584
  %586 = vmatmul.bf16.gmra.mxu0 %v477
  %v587 = vpop.f32.mrf.mxu0
  %v588 = vadd.f32 %v484, %v587
  %v589 = vpop.f32.mrf.mxu0
  %v590 = vadd.f32 %v484, %v589
  %591 = vmatmul.bf16.gmra.mxu0 %v478
  %v592 = vpop.f32.mrf.mxu0
  %v593 = vadd.f32 %v484, %v592
  %v594 = vpop.f32.mrf.mxu0
  %v595 = vadd.f32 %v484, %v594
  %596 = vmatmul.bf16.gmra.mxu0 %v479
  %v597 = vpop.f32.mrf.mxu0
  %v598 = vadd.f32 %v484, %v597
  %v599 = vpop.f32.mrf.mxu0
  %v600 = vadd.f32 %v484, %v599
  %601 = vmatmul.bf16.gmra.mxu0 %v480
  %v602 = vpop.f32.mrf.mxu0
  %v603 = vadd.f32 %v484, %v602
  %v604 = vpop.f32.mrf.mxu0
  %v605 = vadd.f32 %v484, %v604
  %606 = vmatmul.bf16.gmra.mxu0 %v481
  %v607 = vpop.f32.mrf.mxu0
  %v608 = vadd.f32 %v484, %v607
  %v609 = vpop.f32.mrf.mxu0
  %v610 = vadd.f32 %v484, %v609
  %611 = vmatmul.bf16.gmra.mxu0 %v482
  %v612 = vpop.f32.mrf.mxu0
  %v613 = vadd.f32 %v484, %v612
  %v614 = vpop.f32.mrf.mxu0
  %v615 = vadd.f32 %v484, %v614
  %616 = vmatmul.bf16.gmra.mxu0 %v483
  %v617 = vpop.f32.mrf.mxu0
  %v618 = vadd.f32 %v484, %v617
  %v619 = vpop.f32.mrf.mxu0
  %v620 = vadd.f32 %v484, %v619
  %621 = vdwg.mxu0
  %v622 = vld [vmem:[%s1] sm:$0xff]
  %v623 = vld [vmem:[%s1 + $0x8] sm:$0xff]
  %v624 = vld [vmem:[%s1 + $0x10] sm:$0xff]
  %v625 = vld [vmem:[%s1 + $0x18] sm:$0xff]
  %v626 = vld [vmem:[%s1 + $0x20] sm:$0xff]
  %v627 = vld [vmem:[%s1 + $0x28] sm:$0xff]
  %v628 = vld [vmem:[%s1 + $0x30] sm:$0xff]
  %v629 = vld [vmem:[%s1 + $0x38] sm:$0xff]
  %v630 = vld [vmem:[%s1 + $0x40] sm:$0xff]
  %v631 = vld [vmem:[%s1 + $0x48] sm:$0xff]
  %v632 = vld [vmem:[%s1 + $0x50] sm:$0xff]
  %v633 = vld [vmem:[%s1 + $0x58] sm:$0xff]
  %v634 = vld [vmem:[%s1 + $0x60] sm:$0xff]
  %v635 = vld [vmem:[%s1 + $0x68] sm:$0xff]
  %v636 = vld [vmem:[%s1 + $0x70] sm:$0xff]
  %v637 = vld [vmem:[%s1 + $0x78] sm:$0xff]
  %v638 = vld [vmem:[%s1 + $0x80] sm:$0xff]
  %v639 = vld [vmem:[%s1 + $0x88] sm:$0xff]
  %v640 = vld [vmem:[%s1 + $0x90] sm:$0xff]
  %v641 = vld [vmem:[%s1 + $0x98] sm:$0xff]
  %v642 = vld [vmem:[%s1 + $0xa0] sm:$0xff]
  %v643 = vld [vmem:[%s1 + $0xa8] sm:$0xff]
  %v644 = vld [vmem:[%s1 + $0xb0] sm:$0xff]
  %v645 = vld [vmem:[%s1 + $0xb8] sm:$0xff]
  %v646 = vld [vmem:[%s1 + $0xc0] sm:$0xff]
  %v647 = vld [vmem:[%s1 + $0xc8] sm:$0xff]
  %v648 = vld [vmem:[%s1 + $0xd0] sm:$0xff]
  %v649 = vld [vmem:[%s1 + $0xd8] sm:$0xff]
  %v650 = vld [vmem:[%s1 + $0xe0] sm:$0xff]
  %v651 = vld [vmem:[%s1 + $0xe8] sm:$0xff]
  %v652 = vld [vmem:[%s1 + $0xf0] sm:$0xff]
  %v653 = vld [vmem:[%s1 + $0xf8] sm:$0xff]
  %v654 = vmul.f32 %v622, %v622
  %v655 = vmul.f32 %v623, %v623
  %v656 = vmul.f32 %v624, %v624
  %v657 = vmul.f32 %v625, %v625
  %v658 = vmul.f32 %v626, %v626
  %v659 = vmul.f32 %v627, %v627
  %v660 = vmul.f32 %v628, %v628
  %v661 = vmul.f32 %v629, %v629
  %v662 = vmul.f32 %v630, %v630
  %v663 = vmul.f32 %v631, %v631
  %v664 = vmul.f32 %v632, %v632
  %v665 = vmul.f32 %v633, %v633
  %v666 = vmul.f32 %v634, %v634
  %v667 = vmul.f32 %v635, %v635
  %v668 = vmul.f32 %v636, %v636
  %v669 = vmul.f32 %v637, %v637
  %v670 = vmul.f32 %v638, %v638
  %v671 = vmul.f32 %v639, %v639
  %v672 = vmul.f32 %v640, %v640
  %v673 = vmul.f32 %v641, %v641
  %v674 = vmul.f32 %v642, %v642
  %v675 = vmul.f32 %v643, %v643
  %v676 = vmul.f32 %v644, %v644
  %v677 = vmul.f32 %v645, %v645
  %v678 = vmul.f32 %v646, %v646
  %v679 = vmul.f32 %v647, %v647
  %v680 = vmul.f32 %v648, %v648
  %v681 = vmul.f32 %v649, %v649
  %v682 = vmul.f32 %v650, %v650
  %v683 = vmul.f32 %v651, %v651
  %v684 = vmul.f32 %v652, %v652
  %v685 = vmul.f32 %v653, %v653
  %686 = vadd.xlane.f32.xlu0 %v654
  %v687 = vpop.xlane.xlu0 %686
  %688 = vadd.xlane.f32.xlu0 %v655
  %v689 = vpop.xlane.xlu0 %688
  %690 = vadd.xlane.f32.xlu0 %v656
  %v691 = vpop.xlane.xlu0 %690
  %692 = vadd.xlane.f32.xlu0 %v657
  %v693 = vpop.xlane.xlu0 %692
  %694 = vadd.xlane.f32.xlu0 %v658
  %v695 = vpop.xlane.xlu0 %694
  %696 = vadd.xlane.f32.xlu0 %v659
  %v697 = vpop.xlane.xlu0 %696
  %698 = vadd.xlane.f32.xlu0 %v660
  %v699 = vpop.xlane.xlu0 %698
  %700 = vadd.xlane.f32.xlu0 %v661
  %v701 = vpop.xlane.xlu0 %700
  %702 = vadd.xlane.f32.xlu0 %v662
  %v703 = vpop.xlane.xlu0 %702
  %704 = vadd.xlane.f32.xlu0 %v663
  %v705 = vpop.xlane.xlu0 %704
  %706 = vadd.xlane.f32.xlu0 %v664
  %v707 = vpop.xlane.xlu0 %706
  %708 = vadd.xlane.f32.xlu0 %v665
  %v709 = vpop.xlane.xlu0 %708
  %710 = vadd.xlane.f32.xlu0 %v666
  %v711 = vpop.xlane.xlu0 %710
  %712 = vadd.xlane.f32.xlu0 %v667
  %v713 = vpop.xlane.xlu0 %712
  %714 = vadd.xlane.f32.xlu0 %v668
  %v715 = vpop.xlane.xlu0 %714
  %716 = vadd.xlane.f32.xlu0 %v669
  %v717 = vpop.xlane.xlu0 %716
  %718 = vadd.xlane.f32.xlu0 %v670
  %v719 = vpop.xlane.xlu0 %718
  %720 = vadd.xlane.f32.xlu0 %v671
  %v721 = vpop.xlane.xlu0 %720
  %722 = vadd.xlane.f32.xlu0 %v672
  %v723 = vpop.xlane.xlu0 %722
  %724 = vadd.xlane.f32.xlu0 %v673
  %v725 = vpop.xlane.xlu0 %724
  %726 = vadd.xlane.f32.xlu0 %v674
  %v727 = vpop.xlane.xlu0 %726
  %728 = vadd.xlane.f32.xlu0 %v675
  %v729 = vpop.xlane.xlu0 %728
  %730 = vadd.xlane.f32.xlu0 %v676
  %v731 = vpop.xlane.xlu0 %730
  %732 = vadd.xlane.f32.xlu0 %v677
  %v733 = vpop.xlane.xlu0 %732
  %734 = vadd.xlane.f32.xlu0 %v678
  %v735 = vpop.xlane.xlu0 %734
  %736 = vadd.xlane.f32.xlu0 %v679
  %v737 = vpop.xlane.xlu0 %736
  %738 = vadd.xlane.f32.xlu0 %v680
  %v739 = vpop.xlane.xlu0 %738
  %740 = vadd.xlane.f32.xlu0 %v681
  %v741 = vpop.xlane.xlu0 %740
  %742 = vadd.xlane.f32.xlu0 %v682
  %v743 = vpop.xlane.xlu0 %742
  %744 = vadd.xlane.f32.xlu0 %v683
  %v745 = vpop.xlane.xlu0 %744
  %746 = vadd.xlane.f32.xlu0 %v684
  %v747 = vpop.xlane.xlu0 %746
  %748 = vadd.xlane.f32.xlu0 %v685
  %v749 = vpop.xlane.xlu0 %748
  %v750 = vmul.f32 %v687, -0.5
  %v751 = vmul.f32 %v689, -0.5
  %v752 = vmul.f32 %v691, -0.5
  %v753 = vmul.f32 %v693, -0.5
  %v754 = vmul.f32 %v695, -0.5
  %v755 = vmul.f32 %v697, -0.5
  %v756 = vmul.f32 %v699, -0.5
  %v757 = vmul.f32 %v701, -0.5
  %v758 = vmul.f32 %v703, -0.5
  %v759 = vmul.f32 %v705, -0.5
  %v760 = vmul.f32 %v707, -0.5
  %v761 = vmul.f32 %v709, -0.5
  %v762 = vmul.f32 %v711, -0.5
  %v763 = vmul.f32 %v713, -0.5
  %v764 = vmul.f32 %v715, -0.5
  %v765 = vmul.f32 %v717, -0.5
  %v766 = vmul.f32 %v719, -0.5
  %v767 = vmul.f32 %v721, -0.5
  %v768 = vmul.f32 %v723, -0.5
  %v769 = vmul.f32 %v725, -0.5
  %v770 = vmul.f32 %v727, -0.5
  %v771 = vmul.f32 %v729, -0.5
  %v772 = vmul.f32 %v731, -0.5
  %v773 = vmul.f32 %v733, -0.5
  %v774 = vmul.f32 %v735, -0.5
  %v775 = vmul.f32 %v737, -0.5
  %v776 = vmul.f32 %v739, -0.5
  %v777 = vmul.f32 %v741, -0.5
  %v778 = vmul.f32 %v743, -0.5
  %v779 = vmul.f32 %v745, -0.5
  %v780 = vmul.f32 %v747, -0.5
  %v781 = vmul.f32 %v749, -0.5
  %v782 = vperm.slane %v21, 0
  %v783 = vmul.f32 %v782, %v622
  %v784 = vmul.f32 %v782, %v623
  %v785 = vmul.f32 %v782, %v624
  %v786 = vmul.f32 %v782, %v625
  %v787 = vmul.f32 %v782, %v626
  %v788 = vmul.f32 %v782, %v627
  %v789 = vmul.f32 %v782, %v628
  %v790 = vmul.f32 %v782, %v629
  %v791 = vmul.f32 %v782, %v630
  %v792 = vmul.f32 %v782, %v631
  %v793 = vmul.f32 %v782, %v632
  %v794 = vmul.f32 %v782, %v633
  %v795 = vmul.f32 %v782, %v634
  %v796 = vmul.f32 %v782, %v635
  %v797 = vmul.f32 %v782, %v636
  %v798 = vmul.f32 %v782, %v637
  %v799 = vmul.f32 %v782, %v638
  %v800 = vmul.f32 %v782, %v639
  %v801 = vmul.f32 %v782, %v640
  %v802 = vmul.f32 %v782, %v641
  %v803 = vmul.f32 %v782, %v642
  %v804 = vmul.f32 %v782, %v643
  %v805 = vmul.f32 %v782, %v644
  %v806 = vmul.f32 %v782, %v645
  %v807 = vmul.f32 %v782, %v646
  %v808 = vmul.f32 %v782, %v647
  %v809 = vmul.f32 %v782, %v648
  %v810 = vmul.f32 %v782, %v649
  %v811 = vmul.f32 %v782, %v650
  %v812 = vmul.f32 %v782, %v651
  %v813 = vmul.f32 %v782, %v652
  %v814 = vmul.f32 %v782, %v653
  %v815 = vadd.f32 %v543, %v783
  %v816 = vadd.f32 %v545, %v784
  %v817 = vadd.f32 %v548, %v785
  %v818 = vadd.f32 %v550, %v786
  %v819 = vadd.f32 %v553, %v787
  %v820 = vadd.f32 %v555, %v788
  %v821 = vadd.f32 %v558, %v789
  %v822 = vadd.f32 %v560, %v790
  %v823 = vadd.f32 %v563, %v791
  %v824 = vadd.f32 %v565, %v792
  %v825 = vadd.f32 %v568, %v793
  %v826 = vadd.f32 %v570, %v794
  %v827 = vadd.f32 %v573, %v795
  %v828 = vadd.f32 %v575, %v796
  %v829 = vadd.f32 %v578, %v797
  %v830 = vadd.f32 %v580, %v798
  %v831 = vadd.f32 %v583, %v799
  %v832 = vadd.f32 %v585, %v800
  %v833 = vadd.f32 %v588, %v801
  %v834 = vadd.f32 %v590, %v802
  %v835 = vadd.f32 %v593, %v803
  %v836 = vadd.f32 %v595, %v804
  %v837 = vadd.f32 %v598, %v805
  %v838 = vadd.f32 %v600, %v806
  %v839 = vadd.f32 %v603, %v807
  %v840 = vadd.f32 %v605, %v808
  %v841 = vadd.f32 %v608, %v809
  %v842 = vadd.f32 %v610, %v810
  %v843 = vadd.f32 %v613, %v811
  %v844 = vadd.f32 %v615, %v812
  %v845 = vadd.f32 %v618, %v813
  %v846 = vadd.f32 %v620, %v814
  %v847 = vperm.slane %v22, 0
  %v848 = vmul.f32 %v750, %v847
  %v849 = vmul.f32 %v751, %v847
  %v850 = vmul.f32 %v752, %v847
  %v851 = vmul.f32 %v753, %v847
  %v852 = vmul.f32 %v754, %v847
  %v853 = vmul.f32 %v755, %v847
  %v854 = vmul.f32 %v756, %v847
  %v855 = vmul.f32 %v757, %v847
  %v856 = vmul.f32 %v758, %v847
  %v857 = vmul.f32 %v759, %v847
  %v858 = vmul.f32 %v760, %v847
  %v859 = vmul.f32 %v761, %v847
  %v860 = vmul.f32 %v762, %v847
  %v861 = vmul.f32 %v763, %v847
  %v862 = vmul.f32 %v764, %v847
  %v863 = vmul.f32 %v765, %v847
  %v864 = vmul.f32 %v766, %v847
  %v865 = vmul.f32 %v767, %v847
  %v866 = vmul.f32 %v768, %v847
  %v867 = vmul.f32 %v769, %v847
  %v868 = vmul.f32 %v770, %v847
  %v869 = vmul.f32 %v771, %v847
  %v870 = vmul.f32 %v772, %v847
  %v871 = vmul.f32 %v773, %v847
  %v872 = vmul.f32 %v774, %v847
  %v873 = vmul.f32 %v775, %v847
  %v874 = vmul.f32 %v776, %v847
  %v875 = vmul.f32 %v777, %v847
  %v876 = vmul.f32 %v778, %v847
  %v877 = vmul.f32 %v779, %v847
  %v878 = vmul.f32 %v780, %v847
  %v879 = vmul.f32 %v781, %v847
  %v880 = vadd.f32 %v815, %v848
  %v881 = vadd.f32 %v816, %v849
  %v882 = vadd.f32 %v817, %v850
  %v883 = vadd.f32 %v818, %v851
  %v884 = vadd.f32 %v819, %v852
  %v885 = vadd.f32 %v820, %v853
  %v886 = vadd.f32 %v821, %v854
  %v887 = vadd.f32 %v822, %v855
  %v888 = vadd.f32 %v823, %v856
  %v889 = vadd.f32 %v824, %v857
  %v890 = vadd.f32 %v825, %v858
  %v891 = vadd.f32 %v826, %v859
  %v892 = vadd.f32 %v827, %v860
  %v893 = vadd.f32 %v828, %v861
  %v894 = vadd.f32 %v829, %v862
  %v895 = vadd.f32 %v830, %v863
  %v896 = vadd.f32 %v831, %v864
  %v897 = vadd.f32 %v832, %v865
  %v898 = vadd.f32 %v833, %v866
  %v899 = vadd.f32 %v834, %v867
  %v900 = vadd.f32 %v835, %v868
  %v901 = vadd.f32 %v836, %v869
  %v902 = vadd.f32 %v837, %v870
  %v903 = vadd.f32 %v838, %v871
  %v904 = vadd.f32 %v839, %v872
  %v905 = vadd.f32 %v840, %v873
  %v906 = vadd.f32 %v841, %v874
  %v907 = vadd.f32 %v842, %v875
  %v908 = vadd.f32 %v843, %v876
  %v909 = vadd.f32 %v844, %v877
  %v910 = vadd.f32 %v845, %v878
  %v911 = vadd.f32 %v846, %v879
  %912 = vst [vmem:[%s4] sm:$0xff] %v880
  %913 = vst [vmem:[%s4 + $0x8] sm:$0xff] %v881
  %914 = vst [vmem:[%s4 + $0x10] sm:$0xff] %v882
  %915 = vst [vmem:[%s4 + $0x18] sm:$0xff] %v883
  %916 = vst [vmem:[%s4 + $0x20] sm:$0xff] %v884
  %917 = vst [vmem:[%s4 + $0x28] sm:$0xff] %v885
  %918 = vst [vmem:[%s4 + $0x30] sm:$0xff] %v886
  %919 = vst [vmem:[%s4 + $0x38] sm:$0xff] %v887
  %920 = vst [vmem:[%s4 + $0x40] sm:$0xff] %v888
  %921 = vst [vmem:[%s4 + $0x48] sm:$0xff] %v889
  %922 = vst [vmem:[%s4 + $0x50] sm:$0xff] %v890
  %923 = vst [vmem:[%s4 + $0x58] sm:$0xff] %v891
  %924 = vst [vmem:[%s4 + $0x60] sm:$0xff] %v892
  %925 = vst [vmem:[%s4 + $0x68] sm:$0xff] %v893
  %926 = vst [vmem:[%s4 + $0x70] sm:$0xff] %v894
  %927 = vst [vmem:[%s4 + $0x78] sm:$0xff] %v895
  %928 = vst [vmem:[%s4 + $0x80] sm:$0xff] %v896
  %929 = vst [vmem:[%s4 + $0x88] sm:$0xff] %v897
  %930 = vst [vmem:[%s4 + $0x90] sm:$0xff] %v898
  %931 = vst [vmem:[%s4 + $0x98] sm:$0xff] %v899
  %932 = vst [vmem:[%s4 + $0xa0] sm:$0xff] %v900
  %933 = vst [vmem:[%s4 + $0xa8] sm:$0xff] %v901
  %934 = vst [vmem:[%s4 + $0xb0] sm:$0xff] %v902
  %935 = vst [vmem:[%s4 + $0xb8] sm:$0xff] %v903
  %936 = vst [vmem:[%s4 + $0xc0] sm:$0xff] %v904
  %937 = vst [vmem:[%s4 + $0xc8] sm:$0xff] %v905
  %938 = vst [vmem:[%s4 + $0xd0] sm:$0xff] %v906
  %939 = vst [vmem:[%s4 + $0xd8] sm:$0xff] %v907
  %940 = vst [vmem:[%s4 + $0xe0] sm:$0xff] %v908
  %941 = vst [vmem:[%s4 + $0xe8] sm:$0xff] %v909
  %942 = vst [vmem:[%s4 + $0xf0] sm:$0xff] %v910
  %943 = vst [vmem:[%s4 + $0xf8] sm:$0xff] %v911
  // Predicated region
  $region18: #{agent_forward.1} parent=0 // pred_check
    _
  $region19: #{agent_forward.1} parent=0 // pred_check_branch
    %945 = sbr.rel (0) target = $region21
  $region20: #{agent_forward.1} parent=0 // pred_region
    _
  $region21: #{agent_forward.1} parent=0 // pred_fallthru
    _
  // Predicated region
  $region22: #{agent_forward.1} parent=0 // pred_check
    _
  $region23: #{agent_forward.1} parent=0 // pred_check_branch
    %947 = sbr.rel (0) target = $region25
  $region24: #{agent_forward.1} parent=0 // pred_region
    _
  $region25: #{agent_forward.1} parent=0 // pred_fallthru
    _

</llo_original>
